<compile_context>
chip_gen: v5e
topology: v5e:2x2
jax: 0.10.0
libtpu: 0.0.40
codegen_flags: <defaults>
</compile_context>

<pallas_src>
import jax
import jax.numpy as jnp
from jax.experimental import pallas as pl
from jax.experimental.pallas import tpu as pltpu


def _sigmoid_gate_kernel(x_ref, v_ref, scores_ref, experts_ref):
    # x_ref: (tm, D) tile of flattened tokens; v_ref: (D, 1) gate column.
    # MXU matvec with f32 accumulation -> (tm, 1) logits.  Tail-block note:
    # out-of-bounds rows of the last tile flow through dot/sigmoid but are
    # discarded by the masked output write (benign; no in-tile reduction here).
    logits = jnp.dot(x_ref[...], v_ref[...], preferred_element_type=jnp.float32)
    # Relayout the small (tm, 1) column to a lane-dense (1, tm) row *before*
    # the sigmoid: EUP touches tm/128 vregs instead of tm/8 and the output
    # VMEM block avoids 128x lane padding / masked partial stores.
    logits_row = logits.reshape(1, -1)
    scores_ref[...] = jax.nn.sigmoid(logits_row).astype(scores_ref.dtype)
    # Experts are always index 0 (int8) in the reference module; emit them here
    # so no separate XLA fill op / launch is needed.
    experts_ref[...] = jnp.zeros_like(experts_ref)


def _vmem_ceiling():
    """Generation-aware scoped-VMEM request (bytes)."""
    phys = 64 << 20  # conservative fallback = v7x per-TC capacity
    try:
        phys = int(pltpu.get_tpu_info().vmem_capacity_bytes)
    except Exception:
        pass
    # <= ~48 MiB on v7x (64 MiB physical/TC), <= 64 MiB on 128 MiB chips.
    return min(64 << 20, (phys * 3) // 4)


def _pick_row_tile(n_rows, d, in_itemsize, out_itemsize, block_budget_bytes):
    """Largest 128-aligned row tile whose pipeline buffers fit the budget."""
    d_pad = pl.cdiv(d, 128) * 128  # lane padding of the (tm, D) input block
    # Per-row VMEM cost of one pipeline stage:
    #   input block row       : d_pad * itemsize
    #   scores (1, tm) block   : padded to 8 sublanes -> 8 * itemsize per lane
    #   experts (1, tm) int8   : padded to 32 sublanes -> 32 bytes per lane
    per_row = d_pad * in_itemsize + 8 * out_itemsize + 32
    per_row *= 2  # double-buffered pipeline stages
    tm = block_budget_bytes // max(per_row, 1)
    tm = max(128, (tm // 128) * 128)
    return tm


def phatgoose_selector_forward(x, v, *, min_pallas_bytes=1 << 20):
    """x: (B, S, D), v: (1, D) -> (experts int8 (B,S,1), scores x.dtype (B,S,1))."""
    B, S, D = x.shape
    N = B * S
    x2 = x.reshape(N, D)
    v_col = v.reshape(D, 1).astype(x.dtype)

    in_itemsize = x2.dtype.itemsize
    out_itemsize = in_itemsize  # scores emitted in x.dtype

    # Tiny-input fallback: fixed pallas_call + per-step overhead dominates below
    # ~1 MiB of input; a fused XLA matvec+sigmoid is strictly faster there.
    if N * D * in_itemsize < min_pallas_bytes:
        scores = jax.nn.sigmoid(
            jnp.dot(x2, v_col, preferred_element_type=jnp.float32)
        ).astype(x.dtype).reshape(B, S, 1)
        experts = jnp.zeros((B, S, 1), dtype=jnp.int8)
        return experts, scores

    vmem_limit = _vmem_ceiling()
    # Single-buffered resident gate, (8,128)-tile padded: ~round8(D) * 128 words.
    gate_bytes = pl.cdiv(D, 8) * 8 * 128 * in_itemsize
    block_budget = max(vmem_limit - gate_bytes - (6 << 20), 4 << 20)
    tm = _pick_row_tile(N, D, in_itemsize, out_itemsize, block_budget)

    # Megacore/v7x: aim for >= 8 grid steps when there is enough work so each
    # TensorCore gets several pipelined iterations (not a single exposed one),
    # but keep a 512-row floor to stay near the HBM roofline.
    min_rows, target_steps = 512, 8
    if N >= target_steps * min_rows:
        balanced = pl.cdiv(pl.cdiv(N, target_steps), 128) * 128
        tm = min(tm, max(min_rows, balanced))
    if N <= tm:
        tm = N  # one full-extent block: no masked tail at all

    grid = (pl.cdiv(N, tm),)  # unpadded: Pallas masks the tail block

    cost = pl.CostEstimate(
        flops=2 * N * D,
        transcendentals=N,
        bytes_accessed=N * D * in_itemsize + D * in_itemsize + N * out_itemsize + N,
    )

    scores_row, experts_row = pl.pallas_call(
        _sigmoid_gate_kernel,
        out_shape=(
            jax.ShapeDtypeStruct((1, N), x.dtype),
            jax.ShapeDtypeStruct((1, N), jnp.int8),
        ),
        grid_spec=pltpu.PrefetchScalarGridSpec(
            num_scalar_prefetch=0,
            grid=grid,
            in_specs=[
                pl.BlockSpec((tm, D), lambda i: (i, 0)),
                # Constant index_map -> resident gate; single buffer saves VMEM.
                pl.BlockSpec((D, 1), lambda i: (0, 0), pipeline_mode=pl.Buffered(1)),
            ],
            out_specs=[
                pl.BlockSpec((1, tm), lambda i: (0, i)),
                pl.BlockSpec((1, tm), lambda i: (0, i)),
            ],
        ),
        compiler_params=pltpu.CompilerParams(
            dimension_semantics=("parallel",),
            vmem_limit_bytes=vmem_limit,
        ),
        cost_estimate=cost,
    )(x2, v_col)

    scores = scores_row.reshape(B, S, 1)
    experts = experts_row.reshape(B, S, 1)
    return experts, scores


if __name__ == "__main__":
    key = jax.random.PRNGKey(0)
    kx, kv, kx2, kv2 = jax.random.split(key, 4)

    # Small shapes consistent with the module: batch=2, seq=8, hidden=32.
    B, S, D = 2, 8, 32
    x = jax.random.normal(kx, (B, S, D), dtype=jnp.float32)
    # Module's __init__ sets v = zeros((1, input_dim)); use a deterministic
    # random init so the kernel computes something non-trivial.
    v = jax.random.normal(kv, (1, D), dtype=jnp.float32) * 0.02

    # Force the Pallas path at this tiny size so the kernel itself is exercised.
    experts, scores = phatgoose_selector_forward(x, v, min_pallas_bytes=0)
    jax.block_until_ready((experts, scores))
    ref = jax.nn.sigmoid(jnp.einsum("bsd,od->bso", x, v))
    assert scores.shape == (B, S, 1) and experts.shape == (B, S, 1)
    assert experts.dtype == jnp.int8 and bool(jnp.all(experts == 0))
    assert jnp.allclose(scores, ref, atol=1e-5, rtol=1e-5)

    # Default path at the same shape hits the tiny-input XLA fallback.
    experts_fb, scores_fb = phatgoose_selector_forward(x, v)
    jax.block_until_ready((experts_fb, scores_fb))
    assert experts_fb.dtype == jnp.int8 and bool(jnp.all(experts_fb == 0))
    assert jnp.allclose(scores_fb, ref, atol=1e-5, rtol=1e-5)

    # Medium shape exercising the tiled, multi-step Pallas path.
    B2, S2, D2 = 8, 1024, 256
    x_m = jax.random.normal(kx2, (B2, S2, D2), dtype=jnp.float32)
    v_m = jax.random.normal(kv2, (1, D2), dtype=jnp.float32) * 0.02
    experts_m, scores_m = phatgoose_selector_forward(x_m, v_m)
    jax.block_until_ready((experts_m, scores_m))
    ref_m = jax.nn.sigmoid(
        jnp.einsum("bsd,od->bso", x_m, v_m, precision=jax.lax.Precision.HIGHEST)
    )
    assert scores_m.shape == (B2, S2, 1) and experts_m.shape == (B2, S2, 1)
    assert experts_m.dtype == jnp.int8 and bool(jnp.all(experts_m == 0))
    assert jnp.allclose(scores_m, ref_m, atol=1e-4, rtol=1e-4)

    print("KERNEL_OK")
</pallas_src>

<mosaic_0001>
module attributes {stable_mosaic.version = 11 : i64} {
  func.func @_sigmoid_gate_kernel(%arg0: i32, %arg1: memref<16x32xf32, #tpu.memory_space<vmem>>, %arg2: memref<32x1xf32, #tpu.memory_space<vmem>>, %arg3: memref<1x16xf32, #tpu.memory_space<vmem>>, %arg4: memref<1x16xi8, #tpu.memory_space<vmem>>) attributes {dimension_semantics = [#tpu.dimension_semantics<parallel>], iteration_bounds = array<i64: 1>, scalar_prefetch = 0 : i64, scratch_operands = 0 : i64, tpu.core_type = #tpu.core_type<tc>, window_params = [{transform_indices = @transform_0, window_bounds = array<i64: 16, 32>}, {pipeline_mode = #tpu.pipeline_mode<synchronous>, transform_indices = @transform_1, window_bounds = array<i64: 32, 1>}, {transform_indices = @transform_2, window_bounds = array<i64: 1, 16>}, {transform_indices = @transform_3, window_bounds = array<i64: 1, 16>}]} {
    %c0 = arith.constant 0 : index
    %c0_0 = arith.constant 0 : index
    %0 = vector.load %arg1[%c0, %c0_0] : memref<16x32xf32, #tpu.memory_space<vmem>>, vector<16x32xf32>
    %c0_1 = arith.constant 0 : index
    %c0_2 = arith.constant 0 : index
    %1 = vector.load %arg2[%c0_1, %c0_2] : memref<32x1xf32, #tpu.memory_space<vmem>>, vector<32x1xf32>
    %cst = arith.constant dense<0.000000e+00> : vector<16x1xf32>
    %2 = tpu.matmul %0, %1, %cst {dimension_numbers = #tpu.dot_dimension_numbers<[1], [0], [0], [1], [0, 0, 1, 1], [], []>} : vector<16x32xf32>, vector<32x1xf32>, vector<16x1xf32> -> vector<16x1xf32>
    %3 = vector.shape_cast %2 : vector<16x1xf32> to vector<1x16xf32>
    %4 = arith.negf %3 : vector<1x16xf32>
    %5 = math.exp %4 : vector<1x16xf32>
    %cst_3 = arith.constant 1.000000e+00 : f32
    %6 = vector.broadcast %cst_3 : f32 to vector<1x16xf32>
    %7 = arith.addf %6, %5 : vector<1x16xf32>
    %8 = arith.divf %6, %7 : vector<1x16xf32>
    %c0_4 = arith.constant 0 : index
    %c0_5 = arith.constant 0 : index
    %9 = vector.load %arg3[%c0_4, %c0_5] : memref<1x16xf32, #tpu.memory_space<vmem>>, vector<1x16xf32>
    tpu.vector_store %arg3[%c0_4, %c0_5], %8 {strides = array<i32>} : memref<1x16xf32, #tpu.memory_space<vmem>>, vector<1x16xf32>,
    %c0_i8 = arith.constant 0 : i8
    %10 = vector.broadcast %c0_i8 : i8 to vector<1x16xi8>
    %c0_6 = arith.constant 0 : index
    %c0_7 = arith.constant 0 : index
    %11 = vector.load %arg4[%c0_6, %c0_7] : memref<1x16xi8, #tpu.memory_space<vmem>>, vector<1x16xi8>
    tpu.vector_store %arg4[%c0_6, %c0_7], %10 {strides = array<i32>} : memref<1x16xi8, #tpu.memory_space<vmem>>, vector<1x16xi8>,
    return
  }
  func.func @transform_0(%arg0: i32) -> (i32, i32) {
    %c0_i32 = arith.constant 0 : i32
    %c0_i32_0 = arith.constant 0 : i32
    return %arg0, %c0_i32 : i32, i32
  }
  func.func @transform_1(%arg0: i32) -> (i32, i32) {
    %c0_i32 = arith.constant 0 : i32
    %c0_i32_0 = arith.constant 0 : i32
    %c0_i32_1 = arith.constant 0 : i32
    return %c0_i32, %c0_i32_0 : i32, i32
  }
  func.func @transform_2(%arg0: i32) -> (i32, i32) {
    %c0_i32 = arith.constant 0 : i32
    %c0_i32_0 = arith.constant 0 : i32
    return %c0_i32, %arg0 : i32, i32
  }
  func.func @transform_3(%arg0: i32) -> (i32, i32) {
    %c0_i32 = arith.constant 0 : i32
    %c0_i32_0 = arith.constant 0 : i32
    return %c0_i32, %arg0 : i32, i32
  }
}

</mosaic_0001>

<llo_original>
// kernel: tpu_custom_call.1
$region0: #{tpu_custom_call.1}
  #allocation0 [shape = 'u32[]', space=smem, size = 0x4, offset = 0x4, fixed_abs, tag = 'smem constant byte address 0x4 - core index']
  #allocation1 [shape = 'u32[72,128]{1,0:T(1,128)}', space=vmem, size = 0x9000, scoped, tag = 'internal scratch']
  %s0 = inlined_call_operand.vmem [shape: f32[16,32], index: 0, kind: input, shape index: {}]
  %s1 = inlined_call_operand.vmem [shape: f32[32,1], index: 1, kind: input, shape index: {}]
  %s2 = inlined_call_operand.hbm [shape: f32[1,16], index: 2, kind: output, shape index: {0}]
  %s3 = inlined_call_operand.hbm [shape: s8[1,16], index: 3, kind: output, shape index: {1}]
  %4 = xla_tuple %s2, %s3
  %s5 = sld [smem:[#allocation0]]
  $region26: #{tpu_custom_call.1} parent=0
    _
  %s7 = ssub.s32 1, %s5
  %s8 = scalar_select 0, %s7, %s5
  $region1: #{tpu_custom_call.1} parent=0
    #allocation2 [shape = 'u8[512]{0}', space=vmem, size = 0x400, scoped, tag = 'output window, operand 0, single buffered']
    #allocation3 [shape = 's32[1]{0}', space=sflag, size = 0x4, scoped, tag = 'scoped memory for tpu_custom_call.1']
    #allocation4 [shape = 'u8[512]{0}', space=vmem, size = 0x400, scoped, tag = 'output window, operand 1, single buffered']
    #allocation5 [shape = 's32[1]{0}', space=sflag, size = 0x4, scoped, tag = 'scoped memory for tpu_custom_call.1']
    %9 = vsyncpa [#allocation3], 0
    %10 = vsyncpa [#allocation5], 0
    // Predicated region
    $region2: #{tpu_custom_call.1} parent=1 // pred_check
      _
    $region3: #{tpu_custom_call.1} parent=1 // pred_check_branch
      %12 = sbr.rel (0) target = $region5
    $region4: #{tpu_custom_call.1} parent=1 // pred_region
      _
    $region5: #{tpu_custom_call.1} parent=1 // pred_fallthru
      _
    // Predicated region
    $region6: #{tpu_custom_call.1} parent=1 // pred_check
      _
    $region7: #{tpu_custom_call.1} parent=1 // pred_check_branch
      %14 = sbr.rel (0) target = $region9
    $region8: #{tpu_custom_call.1} parent=1 // pred_region
      _
    $region9: #{tpu_custom_call.1} parent=1 // pred_fallthru
      _
    %v16 = vld [vmem:[%s0] sm:$0xff]
    %v17 = vld [vmem:[%s0 + $0x8] sm:$0xff]
    %v18 = vld [vmem:[%s1] sm:$0xff]
    %v19 = vld [vmem:[%s1 + $0x8] sm:$0xff]
    %v20 = vld [vmem:[%s1 + $0x10] sm:$0xff]
    %v21 = vld [vmem:[%s1 + $0x18] sm:$0xff]
    %vm22 = vcmask 261120
    %v24 = vsel %vm22, %v16, 0
    %v27 = vsel %vm22, %v17, 0
    %29 = vmatpush.msra.mxu0 0.0
    %30 = vmatpush.msra.mxu0 0.0
    %31 = vmatpush.msra.mxu0 0.0
    %32 = vmatpush.msra.mxu0 0.0
    %33 = vmatpush.msra.mxu0 0.0
    %34 = vmatpush.msra.mxu0 0.0
    %35 = vmatpush.msra.mxu0 0.0
    %36 = vmatpush.msra.mxu0 0.0
    %37 = vmatpush.msra.mxu0 0.0
    %38 = vmatpush.msra.mxu0 0.0
    %39 = vmatpush.msra.mxu0 0.0
    %40 = vmatpush.msra.mxu0 0.0
    %41 = vmatpush.msra.mxu0 %v21
    %42 = vmatpush.msra.mxu0 %v20
    %43 = vmatpush.msra.mxu0 %v19
    %44 = vmatpush.msra.mxu0 %v18
    %45 = vmatmul.f32.gmra.mxu0 %v24
    %v46 = vpop.f32.mrf.mxu0
    %v47 = vadd.f32 0.0, %v46
    %48 = vmatmul.f32.gmra.mxu0 %v27
    %v49 = vpop.f32.mrf.mxu0
    %v50 = vadd.f32 0.0, %v49
    %51 = vdwg.mxu0
    %v52 = vxor.u32 %v47, 2147483648
    %v53 = vxor.u32 %v50, 2147483648
    %v54 = vmul.f32 %v52, 1.442695
    %v55 = vpow.pop %v54
    %v56 = vmul.f32 %v53, 1.442695
    %v57 = vpow.pop %v56
    %v58 = vadd.f32 %v55, 1.0
    %v59 = vadd.f32 %v57, 1.0
    %v60 = vrcp.pop %v58
    %v61 = vmul.f32 %v58, %v60
    %v62 = vsub.f32 1.0, %v61
    %v63 = vmul.f32 %v60, %v62
    %v64 = vadd.f32 %v60, %v63
    %vm65 = vweird.f32 %v58
    %vm66 = vweird.f32 %v60
    %vm67 = vmor %vm65, %vm66
    %v68 = vsel %vm67, %v60, %v64
    %v69 = vand.u32 2147483647, %v58
    %vm70 = vcmp.eq.f32.partialorder %v69, 8.507059e+37
    %v71 = vand.u32 %v58, 2147483648
    %v72 = vor.u32 1.1754944e-38, %v71
    %v73 = vsel %vm70, %v72, %v68
    %v74 = vmul.f32 1.0, %v73
    %v75 = vrcp.pop %v59
    %v76 = vmul.f32 %v59, %v75
    %v77 = vsub.f32 1.0, %v76
    %v78 = vmul.f32 %v75, %v77
    %v79 = vadd.f32 %v75, %v78
    %vm80 = vweird.f32 %v59
    %vm81 = vweird.f32 %v75
    %vm82 = vmor %vm80, %vm81
    %v83 = vsel %vm82, %v75, %v79
    %v84 = vand.u32 2147483647, %v59
    %vm85 = vcmp.eq.f32.partialorder %v84, 8.507059e+37
    %v86 = vand.u32 %v59, 2147483648
    %v87 = vor.u32 1.1754944e-38, %v86
    %v88 = vsel %vm85, %v87, %v83
    %v89 = vmul.f32 1.0, %v88
    %92 = vset.pattern.permute.xlu0 0
    %93 = vperm.xlu0 %92, %v74
    %v94 = vpop.permute.xlu0 %93
    %95 = vset.pattern.permute.xlu0 0
    %96 = vperm.xlu0 %95, %v89
    %v97 = vpop.permute.xlu0 %96
    %v98 = vlaneseq
    %v99 = vand.u32 %v98, 127
    %v100 = vperm.slane %v94, %v99
    %v101 = vadd.s32 %v99, 4294967288
    %v102 = vperm.slane %v97, %v101
    %vm103 = vcmask 130112
    %v104 = vsel %vm103, %v102, %v100
    %vm106 = vcmask 122880
    %107 = vst.msk [vmem:[#allocation2] sm:$0x1] %vm106, %v104
    %vm108 = vcmask 122880
    %vm109 = vsmask.f32 0
    %vm110 = vmand %vm108, %vm109
    %v111 = vld [vmem:[#allocation4] sm:$0x1]
    %v112 = vsel %vm110, 0, %v111
    %113 = vst [vmem:[#allocation4] sm:$0x1] %v112
    // Predicated region
    $region10: #{tpu_custom_call.1} parent=1 // pred_check
      _
    $region11: #{tpu_custom_call.1} parent=1 // pred_check_branch
      %115 = sbr.rel (0) target = $region13
    $region12: #{tpu_custom_call.1} parent=1 // pred_region
      %117 = vsyncadd [#allocation3], 0
      %s119 = sshll.u32 [#allocation2], 4
      %s120 = int_to_ptr.vmem [resolvable:$true] %s119
      %s121 = sshll.u32 %s2, 4
      %s122 = int_to_ptr.hbm [resolvable:$true] %s121
      %124 = dma.vmem_to_hbm [thread:$0]  %s120, 16, %s122, [#allocation3]
    $region13: #{tpu_custom_call.1} parent=1 // pred_fallthru
      _
    // Predicated region
    $region14: #{tpu_custom_call.1} parent=1 // pred_check
      _
    $region15: #{tpu_custom_call.1} parent=1 // pred_check_branch
      %126 = sbr.rel (0) target = $region17
    $region16: #{tpu_custom_call.1} parent=1 // pred_region
      %128 = vsyncadd [#allocation5], 0
      %s130 = sshll.u32 [#allocation4], 4
      %s131 = int_to_ptr.vmem [resolvable:$true] %s130
      %s132 = sshll.u32 %s3, 4
      %s133 = int_to_ptr.hbm [resolvable:$true] %s132
      %135 = dma.vmem_to_hbm [thread:$0]  %s131, 16, %s133, [#allocation5]
    $region17: #{tpu_custom_call.1} parent=1 // pred_fallthru
      _
    // Predicated region
    $region18: #{tpu_custom_call.1} parent=1 // pred_check
      _
    $region19: #{tpu_custom_call.1} parent=1 // pred_check_branch
      %137 = sbr.rel (0) target = $region21
    $region20: #{tpu_custom_call.1} parent=1 // pred_region
      %139 = dma.done [#allocation3], 16
    $region21: #{tpu_custom_call.1} parent=1 // pred_fallthru
      _
    // Predicated region
    $region22: #{tpu_custom_call.1} parent=1 // pred_check
      _
    $region23: #{tpu_custom_call.1} parent=1 // pred_check_branch
      %141 = sbr.rel (0) target = $region25
    $region24: #{tpu_custom_call.1} parent=1 // pred_region
      %143 = dma.done [#allocation5], 16
    $region25: #{tpu_custom_call.1} parent=1 // pred_fallthru
      _
    %144 = vsyncpa [#allocation3], 1
    %145 = vsyncpa [#allocation5], 1

</llo_original>
